<compile_context>
chip_gen: v7x
topology: tpu7x:2x2x1
jax: 0.10.0
libtpu: 0.0.40
codegen_flags: <defaults>
</compile_context>

<pallas_src>
import numpy as np
import jax
import jax.numpy as jnp
from jax import lax
from jax.experimental import pallas as pl
from jax.experimental.pallas import tpu as pltpu

EPSILON = 1e-7    # epsilon in the torch forward
IN_EPS = 1e-5     # torch nn.InstanceNorm1d default eps


def node_features_kernel(x_ref, sd_ref, ep_ref, ew_ref,
                         w1a_ref, b1a_ref, w1b_ref, b1_ref,
                         w2a_ref, b2a_ref, w2b_ref, b2b_ref, out_ref):
    x = x_ref[...]                       # (N, C_in)  f32
    n = x.shape[0]
    e2 = ew_ref.shape[1]                 # 2*E
    op_t = w2a_ref.dtype                 # MXU operand dtype (f32, or bf16 on v6e/v7x)

    # ---- FCNN_two for every node: needed as the gather source ---------------------------
    h_two = jnp.maximum(
        jnp.dot(x.astype(op_t), w2a_ref[...], preferred_element_type=jnp.float32)
        + b2a_ref[...], 0.0)                                                    # (N, C_h) f32
    h2 = (jnp.dot(h_two.astype(op_t), w2b_ref[...], preferred_element_type=jnp.float32)
          + b2b_ref[...])                                                       # (N, C_out) f32

    # ---- FCNN_one (+ folded FCNN_three(global)) for the LAST row only --------------------
    # (only row N-1 of the update survives the torch clone()-inside-the-loop)
    x_last = x[n - 1:n, :]                                                      # (1, C_in)
    h_one = jnp.maximum(
        jnp.dot(x_last.astype(op_t), w1a_ref[...], preferred_element_type=jnp.float32)
        + b1a_ref[...], 0.0)                                                    # (1, C_h)
    h1 = (jnp.dot(h_one.astype(op_t), w1b_ref[...], preferred_element_type=jnp.float32)
          + b1_ref[...])                                                        # (1, C_out)

    # ---- Gated neighbour aggregation for the last row, fused into 2 matmuls --------------
    w = jax.nn.sigmoid(ew_ref[...])                                             # (1, 2E) f32
    mask = (sd_ref[...] == n - 1).astype(jnp.float32)                           # (1, 2E)
    lhs = mask * w                                                              # (1, 2E) — reused
    denom = EPSILON + jnp.sum(lhs, axis=1, keepdims=True)                       # (1, 1)

    # Transposed incidence one-hot built directly (iota + compare, pure VPU, no transpose).
    e1h_t = (lax.broadcasted_iota(jnp.int32, (e2, n), 1) == ep_ref[...]).astype(op_t)   # (2E, N)
    gathered = jnp.dot(e1h_t, h2.astype(op_t), preferred_element_type=jnp.float32)      # (2E, C_out)
    agg = jnp.dot(lhs.astype(op_t), gathered.astype(op_t),
                  preferred_element_type=jnp.float32)                                   # (1, C_out)

    inter = h1 + agg * pl.reciprocal(denom, approx=True)                        # (1, C_out)

    # ---- InstanceNorm1d (no affine) over the node's feature vector -----------------------
    mean = jnp.mean(inter, axis=-1, keepdims=True)
    var = jnp.mean(jnp.square(inter - mean), axis=-1, keepdims=True)
    normed = (inter - mean) * lax.rsqrt(var + IN_EPS)

    # TODO(synk): nn.Dropout(p=0.1) is constructed in training mode inside forward();
    # implemented here as identity (eval semantics) since torch RNG can't be matched.
    upd = x_last + jnp.maximum(normed, 0.0)                                     # (1, C_in)

    # Faithful to the reference: node_features.clone() happens INSIDE the per-node loop,
    # so only the last node's update (row N-1) survives.  Copy-through + single-row write.
    out_ref[...] = x
    out_ref[n - 1:n, :] = upd


def prepare_node_features_params(params, mxu_dtype=jnp.float32):
    """Weight fusion / transposition done ONCE, outside the per-step jit.
    Only the matmul operand matrices are cast to mxu_dtype; biases stay f32."""
    p1, p2, p3 = params
    w1a, b1a, w1b, b1b = [jnp.asarray(a, jnp.float32) for a in p1]
    w2a, b2a, w2b, b2b = [jnp.asarray(a, jnp.float32) for a in p2]
    w3a, b3a, w3b, b3b = [jnp.asarray(a, jnp.float32) for a in p3]
    return {
        "w1a_t": w1a.T.astype(mxu_dtype), "b1a": b1a[None, :],
        "w1b_t": w1b.T.astype(mxu_dtype), "b1b": b1b[None, :],
        "w2a_t": w2a.T.astype(mxu_dtype), "b2a": b2a[None, :],
        "w2b_t": w2b.T.astype(mxu_dtype), "b2b": b2b[None, :],
        # FCNN_three stays in torch layout/f32: its 1-row matmul runs in the wrapper (XLA).
        "w3a": w3a, "b3a": b3a, "w3b": w3b, "b3b": b3b,
    }


def node_features_forward(node_features, edge_index, edge_features, global_features, prepped):
    """node_features (1,N,C) f32, edge_index (1,2,E) int, edge_features (1,E) f32,
    global_features (1,1,C) f32, prepped = prepare_node_features_params(...)."""
    x = node_features[0].astype(jnp.float32)            # (N, C_in)
    g = global_features[0].astype(jnp.float32)          # (1, C_in)
    ei = edge_index[0].astype(jnp.int32)                 # (2, E)
    ew = edge_features.astype(jnp.float32)               # (1, E)
    n, c_in = x.shape
    e = ew.shape[1]
    c_h = prepped["w1a_t"].shape[1]
    c_out = prepped["w1b_t"].shape[1]

    # FCNN_three(global): a 1-row matmul is the worst MXU occupancy -> plain XLA, folded into b1.
    hg = jnp.maximum(jnp.dot(g, prepped["w3a"].T, precision=lax.Precision.HIGHEST)
                     + prepped["b3a"][None, :], 0.0)
    g3 = jnp.dot(hg, prepped["w3b"].T, precision=lax.Precision.HIGHEST) + prepped["b3b"][None, :]
    b1_fold = prepped["b1b"] + g3                        # (1, C_out)

    src, dst = ei[0], ei[1]
    # Scatter side (lane axis = 2E): [src | dst];  gather side (sublane axis = 2E): [dst ; src].
    sd_row = jnp.concatenate([src, dst])[None, :]        # (1, 2E) int32
    endpoint_col = jnp.concatenate([dst, src])[:, None]  # (2E, 1) int32
    ew_pair = jnp.concatenate([ew, ew], axis=1)          # (1, 2E) f32

    args = (x, sd_row, endpoint_col, ew_pair,
            prepped["w1a_t"], prepped["b1a"], prepped["w1b_t"], b1_fold,
            prepped["w2a_t"], prepped["b2a"], prepped["w2b_t"], prepped["b2b"])
    vmem = pl.BlockSpec(memory_space=pltpu.MemorySpace.VMEM)

    mm_flops = 2 * (n * c_in * c_h + n * c_h * c_out        # FCNN_two, all rows
                    + c_in * c_h + c_h * c_out              # FCNN_one, last row only
                    + 2 * e * n * c_out + 2 * e * c_out)    # gather + gated aggregate
    in_bytes = sum(int(np.prod(a.shape)) * a.dtype.itemsize for a in args)
    cost = pl.CostEstimate(flops=int(mm_flops),
                           transcendentals=int(2 * e + c_out + 1),
                           bytes_accessed=int(in_bytes + n * c_in * 4))

    # N=8 nodes fit in a single VMEM block.  TODO(synk): production sizes need a (TILE_N, C)
    # node-block grid ("parallel" node axis for v7x megacore), resident weights, and a
    # scalar-prefetched edge-block gather pipeline instead of the dense incidence one-hots.
    out = pl.pallas_call(
        node_features_kernel,
        out_shape=jax.ShapeDtypeStruct(x.shape, jnp.float32),
        in_specs=[vmem] * len(args),
        out_specs=vmem,
        cost_estimate=cost,
        compiler_params=pltpu.CompilerParams(has_side_effects=False),
    )(*args)
    return out[None]                                      # (1, N, C)


# ---------------- parameter init (torch nn.Linear style, deterministic) ----------------
def init_fcnn(key, c_in, c_h, c_out):
    k1, k2, k3, k4 = jax.random.split(key, 4)
    lim1 = 1.0 / np.sqrt(c_in)
    lim2 = 1.0 / np.sqrt(c_h)
    w1 = jax.random.uniform(k1, (c_h, c_in), jnp.float32, -lim1, lim1)   # torch (out, in)
    b1 = jax.random.uniform(k2, (c_h,), jnp.float32, -lim1, lim1)
    w2 = jax.random.uniform(k3, (c_out, c_h), jnp.float32, -lim2, lim2)
    b2 = jax.random.uniform(k4, (c_out,), jnp.float32, -lim2, lim2)
    return w1, b1, w2, b2


# ---------------- pure numpy reference mirroring the torch loops ----------------
def reference_forward(node_features, edge_index, edge_features, global_features, fcnn_params):
    nf = np.asarray(node_features, np.float32)
    ei = np.asarray(edge_index)
    ef = np.asarray(edge_features, np.float32)
    gf = np.asarray(global_features, np.float32)

    def sigmoid(z):
        return 1.0 / (1.0 + np.exp(-z))

    def relu(z):
        return np.maximum(z, 0.0)

    def fcnn(v, p):
        w1, b1, w2, b2 = [np.asarray(a, np.float32) for a in p]
        return relu(v @ w1.T + b1) @ w2.T + b2

    p1, p2, p3 = fcnn_params
    n_nodes, n_edges = nf.shape[1], ei.shape[2]
    out = None
    for i in range(n_nodes):
        inter = fcnn(nf[0, i], p1)
        other_nodes, other_edges = [], []
        for j in range(n_edges):
            if ei[0, 0, j] == i:
                other_nodes.append(int(ei[0, 1, j])); other_edges.append(j)
            if ei[0, 1, j] == i:
                other_nodes.append(int(ei[0, 0, j])); other_edges.append(j)
        denom = np.float32(EPSILON)
        nums = []
        for j in other_edges:
            s = sigmoid(ef[0, j]); nums.append(s); denom += s
        for num, k in zip(nums, other_nodes):
            inter = inter + (num / denom) * fcnn(nf[0, k], p2)
        inter = inter + fcnn(gf[0, 0], p3)
        mean = inter.mean(); var = inter.var()
        inter = (inter - mean) / np.sqrt(var + IN_EPS)
        # dropout: identity (eval semantics)
        out = nf.copy()                      # clone INSIDE the loop, as in the torch code
        out[0, i] = nf[0, i] + relu(inter)
    return out


if __name__ == "__main__":
    # Lane-dense sizes: C_IN == C_OUT == 128 (residual requires c_in1 == c_out2), C_H == 64.
    C_IN, C_H, C_OUT = 128, 64, 128
    N, E = 8, 12

    key = jax.random.PRNGKey(0)
    k_nf, k_ef, k_gf, k_ei, k1, k2, k3 = jax.random.split(key, 7)

    node_features = jax.random.normal(k_nf, (1, N, C_IN), jnp.float32)
    edge_features = jax.random.normal(k_ef, (1, E), jnp.float32)
    global_features = jax.random.normal(k_gf, (1, 1, C_IN), jnp.float32)
    edge_index = jax.random.randint(k_ei, (1, 2, E), 0, N, jnp.int32)

    params = (init_fcnn(k1, C_IN, C_H, C_OUT),
              init_fcnn(k2, C_IN, C_H, C_OUT),
              init_fcnn(k3, C_IN, C_H, C_OUT))

    fwd = jax.jit(node_features_forward)

    # --- f32 MXU operands: tight check against the torch-mirroring numpy reference ---
    prepped_f32 = jax.block_until_ready(prepare_node_features_params(params, jnp.float32))
    out_f32 = jax.block_until_ready(
        fwd(node_features, edge_index, edge_features, global_features, prepped_f32))
    ref = reference_forward(node_features, edge_index, edge_features, global_features, params)
    np.testing.assert_allclose(np.asarray(out_f32), ref, rtol=2e-3, atol=2e-3)

    # --- bf16 MXU operands (v6e/v7x production dtype; elementwise stays f32): loose check ---
    prepped_bf16 = jax.block_until_ready(prepare_node_features_params(params, jnp.bfloat16))
    out_bf16 = jax.block_until_ready(
        fwd(node_features, edge_index, edge_features, global_features, prepped_bf16))
    np.testing.assert_allclose(np.asarray(out_bf16), np.asarray(out_f32), rtol=1e-1, atol=1e-1)

    print("KERNEL_OK")
</pallas_src>

<mosaic_0001>
module attributes {stable_mosaic.version = 11 : i64} {
  func.func @node_features_kernel(%arg0: memref<8x128xf32, #tpu.memory_space<vmem>>, %arg1: memref<1x24xi32, #tpu.memory_space<vmem>>, %arg2: memref<24x1xi32, #tpu.memory_space<vmem>>, %arg3: memref<1x24xf32, #tpu.memory_space<vmem>>, %arg4: memref<128x64xf32, #tpu.memory_space<vmem>>, %arg5: memref<1x64xf32, #tpu.memory_space<vmem>>, %arg6: memref<64x128xf32, #tpu.memory_space<vmem>>, %arg7: memref<1x128xf32, #tpu.memory_space<vmem>>, %arg8: memref<128x64xf32, #tpu.memory_space<vmem>>, %arg9: memref<1x64xf32, #tpu.memory_space<vmem>>, %arg10: memref<64x128xf32, #tpu.memory_space<vmem>>, %arg11: memref<1x128xf32, #tpu.memory_space<vmem>>, %arg12: memref<8x128xf32, #tpu.memory_space<vmem>>) attributes {dimension_semantics = [], scalar_prefetch = 0 : i64, scratch_operands = 0 : i64, tpu.core_type = #tpu.core_type<tc>} {
    %c0 = arith.constant 0 : index
    %c0_0 = arith.constant 0 : index
    %0 = vector.load %arg0[%c0, %c0_0] : memref<8x128xf32, #tpu.memory_space<vmem>>, vector<8x128xf32>
    %c0_1 = arith.constant 0 : index
    %c0_2 = arith.constant 0 : index
    %1 = vector.load %arg8[%c0_1, %c0_2] : memref<128x64xf32, #tpu.memory_space<vmem>>, vector<128x64xf32>
    %cst = arith.constant dense<0.000000e+00> : vector<8x64xf32>
    %2 = tpu.matmul %0, %1, %cst {dimension_numbers = #tpu.dot_dimension_numbers<[1], [0], [0], [1], [0, 0, 1, 1], [], []>} : vector<8x128xf32>, vector<128x64xf32>, vector<8x64xf32> -> vector<8x64xf32>
    %c0_3 = arith.constant 0 : index
    %c0_4 = arith.constant 0 : index
    %3 = vector.load %arg9[%c0_3, %c0_4] : memref<1x64xf32, #tpu.memory_space<vmem>>, vector<1x64xf32>
    %4 = vector.broadcast %3 : vector<1x64xf32> to vector<8x64xf32>
    %5 = arith.addf %2, %4 : vector<8x64xf32>
    %cst_5 = arith.constant 0.000000e+00 : f32
    %6 = vector.broadcast %cst_5 : f32 to vector<8x64xf32>
    %7 = arith.maximumf %5, %6 : vector<8x64xf32>
    %c0_6 = arith.constant 0 : index
    %c0_7 = arith.constant 0 : index
    %8 = vector.load %arg10[%c0_6, %c0_7] : memref<64x128xf32, #tpu.memory_space<vmem>>, vector<64x128xf32>
    %cst_8 = arith.constant dense<0.000000e+00> : vector<8x128xf32>
    %9 = tpu.matmul %7, %8, %cst_8 {dimension_numbers = #tpu.dot_dimension_numbers<[1], [0], [0], [1], [0, 0, 1, 1], [], []>} : vector<8x64xf32>, vector<64x128xf32>, vector<8x128xf32> -> vector<8x128xf32>
    %c0_9 = arith.constant 0 : index
    %c0_10 = arith.constant 0 : index
    %10 = vector.load %arg11[%c0_9, %c0_10] : memref<1x128xf32, #tpu.memory_space<vmem>>, vector<1x128xf32>
    %11 = vector.broadcast %10 : vector<1x128xf32> to vector<8x128xf32>
    %12 = arith.addf %9, %11 : vector<8x128xf32>
    %13 = vector.extract_strided_slice %0 {offsets = [7, 0], sizes = [1, 128], strides = [1, 1]} : vector<8x128xf32> to vector<1x128xf32>
    %c0_11 = arith.constant 0 : index
    %c0_12 = arith.constant 0 : index
    %14 = vector.load %arg4[%c0_11, %c0_12] : memref<128x64xf32, #tpu.memory_space<vmem>>, vector<128x64xf32>
    %cst_13 = arith.constant dense<0.000000e+00> : vector<1x64xf32>
    %15 = tpu.matmul %13, %14, %cst_13 {dimension_numbers = #tpu.dot_dimension_numbers<[1], [0], [0], [1], [0, 0, 1, 1], [], []>} : vector<1x128xf32>, vector<128x64xf32>, vector<1x64xf32> -> vector<1x64xf32>
    %c0_14 = arith.constant 0 : index
    %c0_15 = arith.constant 0 : index
    %16 = vector.load %arg5[%c0_14, %c0_15] : memref<1x64xf32, #tpu.memory_space<vmem>>, vector<1x64xf32>
    %17 = arith.addf %15, %16 : vector<1x64xf32>
    %cst_16 = arith.constant 0.000000e+00 : f32
    %18 = vector.broadcast %cst_16 : f32 to vector<1x64xf32>
    %19 = arith.maximumf %17, %18 : vector<1x64xf32>
    %c0_17 = arith.constant 0 : index
    %c0_18 = arith.constant 0 : index
    %20 = vector.load %arg6[%c0_17, %c0_18] : memref<64x128xf32, #tpu.memory_space<vmem>>, vector<64x128xf32>
    %cst_19 = arith.constant dense<0.000000e+00> : vector<1x128xf32>
    %21 = tpu.matmul %19, %20, %cst_19 {dimension_numbers = #tpu.dot_dimension_numbers<[1], [0], [0], [1], [0, 0, 1, 1], [], []>} : vector<1x64xf32>, vector<64x128xf32>, vector<1x128xf32> -> vector<1x128xf32>
    %c0_20 = arith.constant 0 : index
    %c0_21 = arith.constant 0 : index
    %22 = vector.load %arg7[%c0_20, %c0_21] : memref<1x128xf32, #tpu.memory_space<vmem>>, vector<1x128xf32>
    %23 = arith.addf %21, %22 : vector<1x128xf32>
    %c0_22 = arith.constant 0 : index
    %c0_23 = arith.constant 0 : index
    %24 = vector.load %arg3[%c0_22, %c0_23] : memref<1x24xf32, #tpu.memory_space<vmem>>, vector<1x24xf32>
    %25 = arith.negf %24 : vector<1x24xf32>
    %26 = math.exp %25 : vector<1x24xf32>
    %cst_24 = arith.constant 1.000000e+00 : f32
    %27 = vector.broadcast %cst_24 : f32 to vector<1x24xf32>
    %28 = arith.addf %27, %26 : vector<1x24xf32>
    %29 = arith.divf %27, %28 : vector<1x24xf32>
    %c0_25 = arith.constant 0 : index
    %c0_26 = arith.constant 0 : index
    %30 = vector.load %arg1[%c0_25, %c0_26] : memref<1x24xi32, #tpu.memory_space<vmem>>, vector<1x24xi32>
    %c7_i32 = arith.constant 7 : i32
    %31 = vector.broadcast %c7_i32 : i32 to vector<1x24xi32>
    %32 = arith.cmpi eq, %30, %31 : vector<1x24xi32>
    %33 = arith.extui %32 : vector<1x24xi1> to vector<1x24xi32>
    %34 = arith.sitofp %33 : vector<1x24xi32> to vector<1x24xf32>
    %35 = arith.mulf %34, %29 : vector<1x24xf32>
    %cst_27 = arith.constant dense<0.000000e+00> : vector<1xf32>
    %36 = vector.multi_reduction <add>, %35, %cst_27 [1] : vector<1x24xf32> to vector<1xf32>
    %37 = vector.shape_cast %36 : vector<1xf32> to vector<1x1xf32>
    %cst_28 = arith.constant 1.000000e-07 : f32
    %38 = vector.broadcast %cst_28 : f32 to vector<1x1xf32>
    %39 = arith.addf %38, %37 : vector<1x1xf32>
    %40 = tpu.iota {dimensions = array<i32: 1>} : vector<24x8xi32>
    %c0_29 = arith.constant 0 : index
    %c0_30 = arith.constant 0 : index
    %41 = vector.load %arg2[%c0_29, %c0_30] : memref<24x1xi32, #tpu.memory_space<vmem>>, vector<24x1xi32>
    %42 = vector.broadcast %41 : vector<24x1xi32> to vector<24x8xi32>
    %43 = arith.cmpi eq, %40, %42 : vector<24x8xi32>
    %44 = arith.extui %43 : vector<24x8xi1> to vector<24x8xi32>
    %45 = arith.sitofp %44 : vector<24x8xi32> to vector<24x8xf32>
    %cst_31 = arith.constant dense<0.000000e+00> : vector<24x128xf32>
    %46 = tpu.matmul %45, %12, %cst_31 {dimension_numbers = #tpu.dot_dimension_numbers<[1], [0], [0], [1], [0, 0, 1, 1], [], []>} : vector<24x8xf32>, vector<8x128xf32>, vector<24x128xf32> -> vector<24x128xf32>
    %cst_32 = arith.constant dense<0.000000e+00> : vector<1x128xf32>
    %47 = tpu.matmul %35, %46, %cst_32 {dimension_numbers = #tpu.dot_dimension_numbers<[1], [0], [0], [1], [0, 0, 1, 1], [], []>} : vector<1x24xf32>, vector<24x128xf32>, vector<1x128xf32> -> vector<1x128xf32>
    %48 = tpu.reciprocal %39 {approx = true} : vector<1x1xf32> -> vector<1x1xf32>
    %49 = vector.broadcast %48 : vector<1x1xf32> to vector<1x128xf32>
    %50 = arith.mulf %47, %49 : vector<1x128xf32>
    %51 = arith.addf %23, %50 : vector<1x128xf32>
    %cst_33 = arith.constant dense<0.000000e+00> : vector<1xf32>
    %52 = vector.multi_reduction <add>, %51, %cst_33 [1] : vector<1x128xf32> to vector<1xf32>
    %53 = vector.shape_cast %52 : vector<1xf32> to vector<1x1xf32>
    %cst_34 = arith.constant 1.280000e+02 : f32
    %54 = vector.broadcast %cst_34 : f32 to vector<1x1xf32>
    %55 = arith.divf %53, %54 : vector<1x1xf32>
    %56 = vector.broadcast %55 : vector<1x1xf32> to vector<1x128xf32>
    %57 = arith.subf %51, %56 : vector<1x128xf32>
    %58 = arith.mulf %57, %57 : vector<1x128xf32>
    %cst_35 = arith.constant dense<0.000000e+00> : vector<1xf32>
    %59 = vector.multi_reduction <add>, %58, %cst_35 [1] : vector<1x128xf32> to vector<1xf32>
    %60 = vector.shape_cast %59 : vector<1xf32> to vector<1x1xf32>
    %cst_36 = arith.constant 1.280000e+02 : f32
    %61 = vector.broadcast %cst_36 : f32 to vector<1x1xf32>
    %62 = arith.divf %60, %61 : vector<1x1xf32>
    %63 = vector.broadcast %55 : vector<1x1xf32> to vector<1x128xf32>
    %64 = arith.subf %51, %63 : vector<1x128xf32>
    %cst_37 = arith.constant 9.99999974E-6 : f32
    %65 = vector.broadcast %cst_37 : f32 to vector<1x1xf32>
    %66 = arith.addf %62, %65 : vector<1x1xf32>
    %67 = math.rsqrt %66 : vector<1x1xf32>
    %68 = vector.broadcast %67 : vector<1x1xf32> to vector<1x128xf32>
    %69 = arith.mulf %64, %68 : vector<1x128xf32>
    %cst_38 = arith.constant 0.000000e+00 : f32
    %70 = vector.broadcast %cst_38 : f32 to vector<1x128xf32>
    %71 = arith.maximumf %69, %70 : vector<1x128xf32>
    %72 = arith.addf %13, %71 : vector<1x128xf32>
    %c0_39 = arith.constant 0 : index
    %c0_40 = arith.constant 0 : index
    %73 = vector.load %arg12[%c0_39, %c0_40] : memref<8x128xf32, #tpu.memory_space<vmem>>, vector<8x128xf32>
    tpu.vector_store %arg12[%c0_39, %c0_40], %0 {strides = array<i32>} : memref<8x128xf32, #tpu.memory_space<vmem>>, vector<8x128xf32>,
    %c7 = arith.constant 7 : index
    %c0_41 = arith.constant 0 : index
    %74 = vector.load %arg12[%c7, %c0_41] : memref<8x128xf32, #tpu.memory_space<vmem>>, vector<1x128xf32>
    tpu.vector_store %arg12[%c7, %c0_41], %72 {strides = array<i32>} : memref<8x128xf32, #tpu.memory_space<vmem>>, vector<1x128xf32>,
    return
  }
}

</mosaic_0001>

<llo_original>
// kernel: node_features_forward.1
$region0: #{node_features_forward.1}
  #allocation0 [shape = 'u32[]', space=smem, size = 0x4, offset = 0x4, fixed_abs, tag = 'smem constant byte address 0x4 - core index']
  #allocation1 [shape = 'u32[144,128]{1,0:T(1,128)}', space=vmem, size = 0x12000, scoped, tag = 'internal scratch']
  %s0 = inlined_call_operand.vmem [shape: f32[8,128], index: 0, kind: input, shape index: {}]
  %s1 = inlined_call_operand.vmem [shape: s32[1,24], index: 1, kind: input, shape index: {}]
  %s2 = inlined_call_operand.vmem [shape: s32[24,1], index: 2, kind: input, shape index: {}]
  %s3 = inlined_call_operand.vmem [shape: f32[1,24], index: 3, kind: input, shape index: {}]
  %s4 = inlined_call_operand.vmem [shape: f32[128,64], index: 4, kind: input, shape index: {}]
  %s5 = inlined_call_operand.vmem [shape: f32[1,64], index: 5, kind: input, shape index: {}]
  %s6 = inlined_call_operand.vmem [shape: f32[64,128], index: 6, kind: input, shape index: {}]
  %s7 = inlined_call_operand.vmem [shape: f32[1,128], index: 7, kind: input, shape index: {}]
  %s8 = inlined_call_operand.vmem [shape: f32[128,64], index: 8, kind: input, shape index: {}]
  %s9 = inlined_call_operand.vmem [shape: f32[1,64], index: 9, kind: input, shape index: {}]
  %s10 = inlined_call_operand.vmem [shape: f32[64,128], index: 10, kind: input, shape index: {}]
  %s11 = inlined_call_operand.vmem [shape: f32[1,128], index: 11, kind: input, shape index: {}]
  %s12 = inlined_call_operand.hbm [shape: f32[8,128], index: 12, kind: output, shape index: {}]
  %s13 = sld [smem:[#allocation0]]
  $region58: #{node_features_forward.1} parent=0
    _
  %s15 = ssub.s32 1, %s13
  %s16 = scalar_select 0, %s15, %s13
  $region1: #{node_features_forward.1} parent=0
    #allocation2 [shape = 'u8[4096]{0}', space=vmem, size = 0x1000, scoped, tag = 'output window, operand 0, single buffered']
    #allocation3 [shape = 's32[1]{0}', space=sflag, size = 0x4, scoped, tag = 'scoped memory for node_features_forward.1']
    %17 = vsyncpa [#allocation3], 0
    // Predicated region
    $region2: #{node_features_forward.1} parent=1 // pred_check
      _
    $region3: #{node_features_forward.1} parent=1 // pred_check_branch
      %19 = sbr.rel (0) target = $region5
    $region4: #{node_features_forward.1} parent=1 // pred_region
      _
    $region5: #{node_features_forward.1} parent=1 // pred_fallthru
      _
    // Predicated region
    $region6: #{node_features_forward.1} parent=1 // pred_check
      _
    $region7: #{node_features_forward.1} parent=1 // pred_check_branch
      %21 = sbr.rel (0) target = $region9
    $region8: #{node_features_forward.1} parent=1 // pred_region
      _
    $region9: #{node_features_forward.1} parent=1 // pred_fallthru
      _
    // Predicated region
    $region10: #{node_features_forward.1} parent=1 // pred_check
      _
    $region11: #{node_features_forward.1} parent=1 // pred_check_branch
      %23 = sbr.rel (0) target = $region13
    $region12: #{node_features_forward.1} parent=1 // pred_region
      _
    $region13: #{node_features_forward.1} parent=1 // pred_fallthru
      _
    // Predicated region
    $region14: #{node_features_forward.1} parent=1 // pred_check
      _
    $region15: #{node_features_forward.1} parent=1 // pred_check_branch
      %25 = sbr.rel (0) target = $region17
    $region16: #{node_features_forward.1} parent=1 // pred_region
      _
    $region17: #{node_features_forward.1} parent=1 // pred_fallthru
      _
    // Predicated region
    $region18: #{node_features_forward.1} parent=1 // pred_check
      _
    $region19: #{node_features_forward.1} parent=1 // pred_check_branch
      %27 = sbr.rel (0) target = $region21
    $region20: #{node_features_forward.1} parent=1 // pred_region
      _
    $region21: #{node_features_forward.1} parent=1 // pred_fallthru
      _
    // Predicated region
    $region22: #{node_features_forward.1} parent=1 // pred_check
      _
    $region23: #{node_features_forward.1} parent=1 // pred_check_branch
      %29 = sbr.rel (0) target = $region25
    $region24: #{node_features_forward.1} parent=1 // pred_region
      _
    $region25: #{node_features_forward.1} parent=1 // pred_fallthru
      _
    // Predicated region
    $region26: #{node_features_forward.1} parent=1 // pred_check
      _
    $region27: #{node_features_forward.1} parent=1 // pred_check_branch
      %31 = sbr.rel (0) target = $region29
    $region28: #{node_features_forward.1} parent=1 // pred_region
      _
    $region29: #{node_features_forward.1} parent=1 // pred_fallthru
      _
    // Predicated region
    $region30: #{node_features_forward.1} parent=1 // pred_check
      _
    $region31: #{node_features_forward.1} parent=1 // pred_check_branch
      %33 = sbr.rel (0) target = $region33
    $region32: #{node_features_forward.1} parent=1 // pred_region
      _
    $region33: #{node_features_forward.1} parent=1 // pred_fallthru
      _
    // Predicated region
    $region34: #{node_features_forward.1} parent=1 // pred_check
      _
    $region35: #{node_features_forward.1} parent=1 // pred_check_branch
      %35 = sbr.rel (0) target = $region37
    $region36: #{node_features_forward.1} parent=1 // pred_region
      _
    $region37: #{node_features_forward.1} parent=1 // pred_fallthru
      _
    // Predicated region
    $region38: #{node_features_forward.1} parent=1 // pred_check
      _
    $region39: #{node_features_forward.1} parent=1 // pred_check_branch
      %37 = sbr.rel (0) target = $region41
    $region40: #{node_features_forward.1} parent=1 // pred_region
      _
    $region41: #{node_features_forward.1} parent=1 // pred_fallthru
      _
    // Predicated region
    $region42: #{node_features_forward.1} parent=1 // pred_check
      _
    $region43: #{node_features_forward.1} parent=1 // pred_check_branch
      %39 = sbr.rel (0) target = $region45
    $region44: #{node_features_forward.1} parent=1 // pred_region
      _
    $region45: #{node_features_forward.1} parent=1 // pred_fallthru
      _
    // Predicated region
    $region46: #{node_features_forward.1} parent=1 // pred_check
      _
    $region47: #{node_features_forward.1} parent=1 // pred_check_branch
      %41 = sbr.rel (0) target = $region49
    $region48: #{node_features_forward.1} parent=1 // pred_region
      _
    $region49: #{node_features_forward.1} parent=1 // pred_fallthru
      _
    %v42 = vld [vmem:[%s0] sm:$0xff]
    %v43 = vld [vmem:[%s8] sm:$0xff]
    %v44 = vld [vmem:[%s8 + $0x8] sm:$0xff]
    %v45 = vld [vmem:[%s8 + $0x10] sm:$0xff]
    %v46 = vld [vmem:[%s8 + $0x18] sm:$0xff]
    %v47 = vld [vmem:[%s8 + $0x20] sm:$0xff]
    %v48 = vld [vmem:[%s8 + $0x28] sm:$0xff]
    %v49 = vld [vmem:[%s8 + $0x30] sm:$0xff]
    %v50 = vld [vmem:[%s8 + $0x38] sm:$0xff]
    %v51 = vld [vmem:[%s8 + $0x40] sm:$0xff]
    %v52 = vld [vmem:[%s8 + $0x48] sm:$0xff]
    %v53 = vld [vmem:[%s8 + $0x50] sm:$0xff]
    %v54 = vld [vmem:[%s8 + $0x58] sm:$0xff]
    %v55 = vld [vmem:[%s8 + $0x60] sm:$0xff]
    %v56 = vld [vmem:[%s8 + $0x68] sm:$0xff]
    %v57 = vld [vmem:[%s8 + $0x70] sm:$0xff]
    %v58 = vld [vmem:[%s8 + $0x78] sm:$0xff]
    %v59 = vld [vmem:[%s9] sm:$0x1]
    %v61 = vlaneseq
    %v62 = vshrl.u32 %v61, 7
    %v63 = vsub.s32 0, %v62
    %v64 = vrot.slane %v59, %v63
    %66 = vmatprep.subr.mxu0 0.0
    %67 = vmatpush1.msra.mxu0 %v43
    %68 = vmatprep.subr.mxu0 0.0
    %69 = vmatpush1.msra.mxu0 %v44
    %70 = vmatprep.subr.mxu0 0.0
    %71 = vmatpush1.msra.mxu0 %v45
    %72 = vmatprep.subr.mxu0 0.0
    %73 = vmatpush1.msra.mxu0 %v46
    %74 = vmatprep.subr.mxu0 0.0
    %75 = vmatpush1.msra.mxu0 %v47
    %76 = vmatprep.subr.mxu0 0.0
    %77 = vmatpush1.msra.mxu0 %v48
    %78 = vmatprep.subr.mxu0 0.0
    %79 = vmatpush1.msra.mxu0 %v49
    %80 = vmatprep.subr.mxu0 0.0
    %81 = vmatpush1.msra.mxu0 %v50
    %82 = vmatprep.subr.mxu0 0.0
    %83 = vmatpush1.msra.mxu0 %v51
    %84 = vmatprep.subr.mxu0 0.0
    %85 = vmatpush1.msra.mxu0 %v52
    %86 = vmatprep.subr.mxu0 0.0
    %87 = vmatpush1.msra.mxu0 %v53
    %88 = vmatprep.subr.mxu0 0.0
    %89 = vmatpush1.msra.mxu0 %v54
    %90 = vmatprep.subr.mxu0 0.0
    %91 = vmatpush1.msra.mxu0 %v55
    %92 = vmatprep.subr.mxu0 0.0
    %93 = vmatpush1.msra.mxu0 %v56
    %94 = vmatprep.subr.mxu0 0.0
    %95 = vmatpush1.msra.mxu0 %v57
    %96 = vmatprep.subr.mxu0 0.0
    %97 = vmatpush1.msra.mxu0 %v58
    %98 = vmatprep.subr.mxu0 0.0
    %99 = vmatpush1.msra.mxu0 0.0
    %100 = vmatprep.subr.mxu0 0.0
    %101 = vmatpush1.msra.mxu0 0.0
    %102 = vmatprep.subr.mxu0 0.0
    %103 = vmatpush1.msra.mxu0 0.0
    %104 = vmatprep.subr.mxu0 0.0
    %105 = vmatpush1.msra.mxu0 0.0
    %106 = vmatprep.subr.mxu0 0.0
    %107 = vmatpush1.msra.mxu0 0.0
    %108 = vmatprep.subr.mxu0 0.0
    %109 = vmatpush1.msra.mxu0 0.0
    %110 = vmatprep.subr.mxu0 0.0
    %111 = vmatpush1.msra.mxu0 0.0
    %112 = vmatprep.subr.mxu0 0.0
    %113 = vmatpush1.msra.mxu0 0.0
    %114 = vmatprep.subr.mxu0 0.0
    %115 = vmatpush1.msra.mxu0 0.0
    %116 = vmatprep.subr.mxu0 0.0
    %117 = vmatpush1.msra.mxu0 0.0
    %118 = vmatprep.subr.mxu0 0.0
    %119 = vmatpush1.msra.mxu0 0.0
    %120 = vmatprep.subr.mxu0 0.0
    %121 = vmatpush1.msra.mxu0 0.0
    %122 = vmatprep.subr.mxu0 0.0
    %123 = vmatpush1.msra.mxu0 0.0
    %124 = vmatprep.subr.mxu0 0.0
    %125 = vmatpush1.msra.mxu0 0.0
    %126 = vmatprep.subr.mxu0 0.0
    %127 = vmatpush1.msra.mxu0 0.0
    %128 = vmatprep.subr.mxu0 0.0
    %129 = vmatpush1.msra.mxu0 0.0
    %130 = vmatprep.mubr.f32.mxu0 0.0
    %131 = vmatmul.mubr.f32.gmra.mrb[0].mxu0 %v42
    %v132 = vpop.f32.mrb[0].mxu0
    %v133 = vadd.f32 %v64, %v132
    %v134 = vpop.f32.mrb[0].mxu0
    %135 = vdwg.mxu0
    %v136 = vmax.f32 %v133, 0.0
    %v137 = vld [vmem:[%s10] sm:$0xff]
    %v138 = vld [vmem:[%s10 + $0x8] sm:$0xff]
    %v139 = vld [vmem:[%s10 + $0x10] sm:$0xff]
    %v140 = vld [vmem:[%s10 + $0x18] sm:$0xff]
    %v141 = vld [vmem:[%s10 + $0x20] sm:$0xff]
    %v142 = vld [vmem:[%s10 + $0x28] sm:$0xff]
    %v143 = vld [vmem:[%s10 + $0x30] sm:$0xff]
    %v144 = vld [vmem:[%s10 + $0x38] sm:$0xff]
    %v145 = vld [vmem:[%s11] sm:$0x1]
    %v147 = vlaneseq
    %v148 = vshrl.u32 %v147, 7
    %v149 = vsub.s32 0, %v148
    %v150 = vrot.slane %v145, %v149
    %vm152 = vcmask 523264
    %v154 = vsel %vm152, %v136, 0
    %156 = vmatprep.subr.mxu0 0.0
    %157 = vmatpush1.msra.mxu0 %v137
    %158 = vmatprep.subr.mxu0 0.0
    %159 = vmatpush1.msra.mxu0 %v138
    %160 = vmatprep.subr.mxu0 0.0
    %161 = vmatpush1.msra.mxu0 %v139
    %162 = vmatprep.subr.mxu0 0.0
    %163 = vmatpush1.msra.mxu0 %v140
    %164 = vmatprep.subr.mxu0 0.0
    %165 = vmatpush1.msra.mxu0 %v141
    %166 = vmatprep.subr.mxu0 0.0
    %167 = vmatpush1.msra.mxu0 %v142
    %168 = vmatprep.subr.mxu0 0.0
    %169 = vmatpush1.msra.mxu0 %v143
    %170 = vmatprep.subr.mxu0 0.0
    %171 = vmatpush1.msra.mxu0 %v144
    %172 = vmatprep.subr.mxu0 0.0
    %173 = vmatpush1.msra.mxu0 0.0
    %174 = vmatprep.subr.mxu0 0.0
    %175 = vmatpush1.msra.mxu0 0.0
    %176 = vmatprep.subr.mxu0 0.0
    %177 = vmatpush1.msra.mxu0 0.0
    %178 = vmatprep.subr.mxu0 0.0
    %179 = vmatpush1.msra.mxu0 0.0
    %180 = vmatprep.subr.mxu0 0.0
    %181 = vmatpush1.msra.mxu0 0.0
    %182 = vmatprep.subr.mxu0 0.0
    %183 = vmatpush1.msra.mxu0 0.0
    %184 = vmatprep.subr.mxu0 0.0
    %185 = vmatpush1.msra.mxu0 0.0
    %186 = vmatprep.subr.mxu0 0.0
    %187 = vmatpush1.msra.mxu0 0.0
    %188 = vmatprep.subr.mxu0 0.0
    %189 = vmatpush1.msra.mxu0 0.0
    %190 = vmatprep.subr.mxu0 0.0
    %191 = vmatpush1.msra.mxu0 0.0
    %192 = vmatprep.subr.mxu0 0.0
    %193 = vmatpush1.msra.mxu0 0.0
    %194 = vmatprep.subr.mxu0 0.0
    %195 = vmatpush1.msra.mxu0 0.0
    %196 = vmatprep.subr.mxu0 0.0
    %197 = vmatpush1.msra.mxu0 0.0
    %198 = vmatprep.subr.mxu0 0.0
    %199 = vmatpush1.msra.mxu0 0.0
    %200 = vmatprep.subr.mxu0 0.0
    %201 = vmatpush1.msra.mxu0 0.0
    %202 = vmatprep.subr.mxu0 0.0
    %203 = vmatpush1.msra.mxu0 0.0
    %204 = vmatprep.subr.mxu0 0.0
    %205 = vmatpush1.msra.mxu0 0.0
    %206 = vmatprep.subr.mxu0 0.0
    %207 = vmatpush1.msra.mxu0 0.0
    %208 = vmatprep.subr.mxu0 0.0
    %209 = vmatpush1.msra.mxu0 0.0
    %210 = vmatprep.subr.mxu0 0.0
    %211 = vmatpush1.msra.mxu0 0.0
    %212 = vmatprep.subr.mxu0 0.0
    %213 = vmatpush1.msra.mxu0 0.0
    %214 = vmatprep.subr.mxu0 0.0
    %215 = vmatpush1.msra.mxu0 0.0
    %216 = vmatprep.subr.mxu0 0.0
    %217 = vmatpush1.msra.mxu0 0.0
    %218 = vmatprep.subr.mxu0 0.0
    %219 = vmatpush1.msra.mxu0 0.0
    %220 = vmatprep.mubr.f32.mxu0 0.0
    %221 = vmatmul.mubr.f32.gmra.mrb[0].mxu0 %v154
    %v222 = vpop.f32.mrb[0].mxu0
    %v223 = vadd.f32 %v150, %v222
    %v224 = vpop.f32.mrb[0].mxu0
    %225 = vdwg.mxu0
    %v226 = vld [vmem:[%s4] sm:$0xff]
    %v227 = vld [vmem:[%s4 + $0x8] sm:$0xff]
    %v228 = vld [vmem:[%s4 + $0x10] sm:$0xff]
    %v229 = vld [vmem:[%s4 + $0x18] sm:$0xff]
    %v230 = vld [vmem:[%s4 + $0x20] sm:$0xff]
    %v231 = vld [vmem:[%s4 + $0x28] sm:$0xff]
    %v232 = vld [vmem:[%s4 + $0x30] sm:$0xff]
    %v233 = vld [vmem:[%s4 + $0x38] sm:$0xff]
    %v234 = vld [vmem:[%s4 + $0x40] sm:$0xff]
    %v235 = vld [vmem:[%s4 + $0x48] sm:$0xff]
    %v236 = vld [vmem:[%s4 + $0x50] sm:$0xff]
    %v237 = vld [vmem:[%s4 + $0x58] sm:$0xff]
    %v238 = vld [vmem:[%s4 + $0x60] sm:$0xff]
    %v239 = vld [vmem:[%s4 + $0x68] sm:$0xff]
    %v240 = vld [vmem:[%s4 + $0x70] sm:$0xff]
    %v241 = vld [vmem:[%s4 + $0x78] sm:$0xff]
    %v242 = vld [vmem:[%s5] sm:$0x1]
    %v244 = vrot.slane %v42, 7
    %246 = vmatprep.subr.mxu0 0.0
    %247 = vmatpush1.msra.mxu0 %v226
    %248 = vmatprep.subr.mxu0 0.0
    %249 = vmatpush1.msra.mxu0 %v227
    %250 = vmatprep.subr.mxu0 0.0
    %251 = vmatpush1.msra.mxu0 %v228
    %252 = vmatprep.subr.mxu0 0.0
    %253 = vmatpush1.msra.mxu0 %v229
    %254 = vmatprep.subr.mxu0 0.0
    %255 = vmatpush1.msra.mxu0 %v230
    %256 = vmatprep.subr.mxu0 0.0
    %257 = vmatpush1.msra.mxu0 %v231
    %258 = vmatprep.subr.mxu0 0.0
    %259 = vmatpush1.msra.mxu0 %v232
    %260 = vmatprep.subr.mxu0 0.0
    %261 = vmatpush1.msra.mxu0 %v233
    %262 = vmatprep.subr.mxu0 0.0
    %263 = vmatpush1.msra.mxu0 %v234
    %264 = vmatprep.subr.mxu0 0.0
    %265 = vmatpush1.msra.mxu0 %v235
    %266 = vmatprep.subr.mxu0 0.0
    %267 = vmatpush1.msra.mxu0 %v236
    %268 = vmatprep.subr.mxu0 0.0
    %269 = vmatpush1.msra.mxu0 %v237
    %270 = vmatprep.subr.mxu0 0.0
    %271 = vmatpush1.msra.mxu0 %v238
    %272 = vmatprep.subr.mxu0 0.0
    %273 = vmatpush1.msra.mxu0 %v239
    %274 = vmatprep.subr.mxu0 0.0
    %275 = vmatpush1.msra.mxu0 %v240
    %276 = vmatprep.subr.mxu0 0.0
    %277 = vmatpush1.msra.mxu0 %v241
    %278 = vmatprep.subr.mxu0 0.0
    %279 = vmatpush1.msra.mxu0 0.0
    %280 = vmatprep.subr.mxu0 0.0
    %281 = vmatpush1.msra.mxu0 0.0
    %282 = vmatprep.subr.mxu0 0.0
    %283 = vmatpush1.msra.mxu0 0.0
    %284 = vmatprep.subr.mxu0 0.0
    %285 = vmatpush1.msra.mxu0 0.0
    %286 = vmatprep.subr.mxu0 0.0
    %287 = vmatpush1.msra.mxu0 0.0
    %288 = vmatprep.subr.mxu0 0.0
    %289 = vmatpush1.msra.mxu0 0.0
    %290 = vmatprep.subr.mxu0 0.0
    %291 = vmatpush1.msra.mxu0 0.0
    %292 = vmatprep.subr.mxu0 0.0
    %293 = vmatpush1.msra.mxu0 0.0
    %294 = vmatprep.subr.mxu0 0.0
    %295 = vmatpush1.msra.mxu0 0.0
    %296 = vmatprep.subr.mxu0 0.0
    %297 = vmatpush1.msra.mxu0 0.0
    %298 = vmatprep.subr.mxu0 0.0
    %299 = vmatpush1.msra.mxu0 0.0
    %300 = vmatprep.subr.mxu0 0.0
    %301 = vmatpush1.msra.mxu0 0.0
    %302 = vmatprep.subr.mxu0 0.0
    %303 = vmatpush1.msra.mxu0 0.0
    %304 = vmatprep.subr.mxu0 0.0
    %305 = vmatpush1.msra.mxu0 0.0
    %306 = vmatprep.subr.mxu0 0.0
    %307 = vmatpush1.msra.mxu0 0.0
    %308 = vmatprep.subr.mxu0 0.0
    %309 = vmatpush1.msra.mxu0 0.0
    %310 = vmatprep.mubr.f32.mxu0 0.0
    %311 = vmatmul.mubr.f32.gmra.mrb[0].mxu0 %v244
    %v312 = vpop.f32.mrb[0].mxu0
    %v313 = vadd.f32 %v242, %v312
    %v314 = vpop.f32.mrb[0].mxu0
    %315 = vdwg.mxu0
    %v316 = vmax.f32 %v313, 0.0
    %v317 = vld [vmem:[%s6] sm:$0xff]
    %v318 = vld [vmem:[%s6 + $0x8] sm:$0xff]
    %v319 = vld [vmem:[%s6 + $0x10] sm:$0xff]
    %v320 = vld [vmem:[%s6 + $0x18] sm:$0xff]
    %v321 = vld [vmem:[%s6 + $0x20] sm:$0xff]
    %v322 = vld [vmem:[%s6 + $0x28] sm:$0xff]
    %v323 = vld [vmem:[%s6 + $0x30] sm:$0xff]
    %v324 = vld [vmem:[%s6 + $0x38] sm:$0xff]
    %v325 = vld [vmem:[%s7] sm:$0x1]
    %v327 = vsel %vm152, %v316, 0
    %329 = vmatprep.subr.mxu0 0.0
    %330 = vmatpush1.msra.mxu0 %v317
    %331 = vmatprep.subr.mxu0 0.0
    %332 = vmatpush1.msra.mxu0 %v318
    %333 = vmatprep.subr.mxu0 0.0
    %334 = vmatpush1.msra.mxu0 %v319
    %335 = vmatprep.subr.mxu0 0.0
    %336 = vmatpush1.msra.mxu0 %v320
    %337 = vmatprep.subr.mxu0 0.0
    %338 = vmatpush1.msra.mxu0 %v321
    %339 = vmatprep.subr.mxu0 0.0
    %340 = vmatpush1.msra.mxu0 %v322
    %341 = vmatprep.subr.mxu0 0.0
    %342 = vmatpush1.msra.mxu0 %v323
    %343 = vmatprep.subr.mxu0 0.0
    %344 = vmatpush1.msra.mxu0 %v324
    %345 = vmatprep.subr.mxu0 0.0
    %346 = vmatpush1.msra.mxu0 0.0
    %347 = vmatprep.subr.mxu0 0.0
    %348 = vmatpush1.msra.mxu0 0.0
    %349 = vmatprep.subr.mxu0 0.0
    %350 = vmatpush1.msra.mxu0 0.0
    %351 = vmatprep.subr.mxu0 0.0
    %352 = vmatpush1.msra.mxu0 0.0
    %353 = vmatprep.subr.mxu0 0.0
    %354 = vmatpush1.msra.mxu0 0.0
    %355 = vmatprep.subr.mxu0 0.0
    %356 = vmatpush1.msra.mxu0 0.0
    %357 = vmatprep.subr.mxu0 0.0
    %358 = vmatpush1.msra.mxu0 0.0
    %359 = vmatprep.subr.mxu0 0.0
    %360 = vmatpush1.msra.mxu0 0.0
    %361 = vmatprep.subr.mxu0 0.0
    %362 = vmatpush1.msra.mxu0 0.0
    %363 = vmatprep.subr.mxu0 0.0
    %364 = vmatpush1.msra.mxu0 0.0
    %365 = vmatprep.subr.mxu0 0.0
    %366 = vmatpush1.msra.mxu0 0.0
    %367 = vmatprep.subr.mxu0 0.0
    %368 = vmatpush1.msra.mxu0 0.0
    %369 = vmatprep.subr.mxu0 0.0
    %370 = vmatpush1.msra.mxu0 0.0
    %371 = vmatprep.subr.mxu0 0.0
    %372 = vmatpush1.msra.mxu0 0.0
    %373 = vmatprep.subr.mxu0 0.0
    %374 = vmatpush1.msra.mxu0 0.0
    %375 = vmatprep.subr.mxu0 0.0
    %376 = vmatpush1.msra.mxu0 0.0
    %377 = vmatprep.subr.mxu0 0.0
    %378 = vmatpush1.msra.mxu0 0.0
    %379 = vmatprep.subr.mxu0 0.0
    %380 = vmatpush1.msra.mxu0 0.0
    %381 = vmatprep.subr.mxu0 0.0
    %382 = vmatpush1.msra.mxu0 0.0
    %383 = vmatprep.subr.mxu0 0.0
    %384 = vmatpush1.msra.mxu0 0.0
    %385 = vmatprep.subr.mxu0 0.0
    %386 = vmatpush1.msra.mxu0 0.0
    %387 = vmatprep.subr.mxu0 0.0
    %388 = vmatpush1.msra.mxu0 0.0
    %389 = vmatprep.subr.mxu0 0.0
    %390 = vmatpush1.msra.mxu0 0.0
    %391 = vmatprep.subr.mxu0 0.0
    %392 = vmatpush1.msra.mxu0 0.0
    %393 = vmatprep.mubr.f32.mxu0 0.0
    %394 = vmatmul.mubr.f32.gmra.mrb[0].mxu0 %v327
    %v395 = vpop.f32.mrb[0].mxu0
    %v396 = vadd.f32 %v325, %v395
    %v397 = vpop.f32.mrb[0].mxu0
    %398 = vdwg.mxu0
    %v399 = vld [vmem:[%s3] sm:$0x1]
    %v400 = vxor.u32 %v399, 2147483648
    %v401 = vmul.f32 %v400, 1.442695
    %v402 = vpow.pop %v401
    %v403 = vadd.f32 %v402, 1.0
    %v404 = vrcp.pop %v403
    %v405 = vmul.f32 1.0, %v404
    %v406 = vld [vmem:[%s1] sm:$0x1]
    %vm407 = vcmp.eq.s32.totalorder %v406, 7
    %v408 = vsel %vm407, 1, 0
    %v409 = vcvt.s32.f32 %v408
    %v410 = vmul.f32 %v409, %v405
    %vm411 = vcmask 188416
    %v412 = vsel %vm411, %v410, 0.0
    %413 = vadd.xlane.f32.xlu0 %v412
    %v414 = vpop.xlane.xlu0 %413
    %v415 = vadd.f32 %v414, 1e-07
    %v416 = vlaneseq
    %v417 = vand.u32 %v416, 127
    %v418 = vld [vmem:[%s2] sm:$0xff]
    %v419 = vld [vmem:[%s2 + $0x8] sm:$0xff]
    %v420 = vld [vmem:[%s2 + $0x10] sm:$0xff]
    %421 = vset.pattern.permute.xlu0 0
    %422 = vperm.xlu0 %421, %v418
    %v423 = vpop.permute.xlu0 %422
    %424 = vset.pattern.permute.xlu0 0
    %425 = vperm.xlu0 %424, %v419
    %v426 = vpop.permute.xlu0 %425
    %427 = vset.pattern.permute.xlu0 0
    %428 = vperm.xlu0 %427, %v420
    %v429 = vpop.permute.xlu0 %428
    %vm430 = vcmp.eq.s32.totalorder %v417, %v423
    %vm431 = vcmp.eq.s32.totalorder %v417, %v426
    %vm432 = vcmp.eq.s32.totalorder %v417, %v429
    %v433 = vsel %vm430, 1, 0
    %v434 = vsel %vm431, 1, 0
    %v435 = vsel %vm432, 1, 0
    %v436 = vcvt.s32.f32 %v433
    %v437 = vcvt.s32.f32 %v434
    %v438 = vcvt.s32.f32 %v435
    %vm439 = vcmask 64512
    %v441 = vsel %vm439, %v436, 0
    %v444 = vsel %vm439, %v437, 0
    %v447 = vsel %vm439, %v438, 0
    %449 = vmatprep.subr.mxu0 0.0
    %450 = vmatpush1.msra.mxu0 %v223
    %451 = vmatprep.subr.mxu0 0.0
    %452 = vmatpush1.msra.mxu0 0.0
    %453 = vmatprep.subr.mxu0 0.0
    %454 = vmatpush1.msra.mxu0 0.0
    %455 = vmatprep.subr.mxu0 0.0
    %456 = vmatpush1.msra.mxu0 0.0
    %457 = vmatprep.subr.mxu0 0.0
    %458 = vmatpush1.msra.mxu0 0.0
    %459 = vmatprep.subr.mxu0 0.0
    %460 = vmatpush1.msra.mxu0 0.0
    %461 = vmatprep.subr.mxu0 0.0
    %462 = vmatpush1.msra.mxu0 0.0
    %463 = vmatprep.subr.mxu0 0.0
    %464 = vmatpush1.msra.mxu0 0.0
    %465 = vmatprep.subr.mxu0 0.0
    %466 = vmatpush1.msra.mxu0 0.0
    %467 = vmatprep.subr.mxu0 0.0
    %468 = vmatpush1.msra.mxu0 0.0
    %469 = vmatprep.subr.mxu0 0.0
    %470 = vmatpush1.msra.mxu0 0.0
    %471 = vmatprep.subr.mxu0 0.0
    %472 = vmatpush1.msra.mxu0 0.0
    %473 = vmatprep.subr.mxu0 0.0
    %474 = vmatpush1.msra.mxu0 0.0
    %475 = vmatprep.subr.mxu0 0.0
    %476 = vmatpush1.msra.mxu0 0.0
    %477 = vmatprep.subr.mxu0 0.0
    %478 = vmatpush1.msra.mxu0 0.0
    %479 = vmatprep.subr.mxu0 0.0
    %480 = vmatpush1.msra.mxu0 0.0
    %481 = vmatprep.subr.mxu0 0.0
    %482 = vmatpush1.msra.mxu0 0.0
    %483 = vmatprep.subr.mxu0 0.0
    %484 = vmatpush1.msra.mxu0 0.0
    %485 = vmatprep.subr.mxu0 0.0
    %486 = vmatpush1.msra.mxu0 0.0
    %487 = vmatprep.subr.mxu0 0.0
    %488 = vmatpush1.msra.mxu0 0.0
    %489 = vmatprep.subr.mxu0 0.0
    %490 = vmatpush1.msra.mxu0 0.0
    %491 = vmatprep.subr.mxu0 0.0
    %492 = vmatpush1.msra.mxu0 0.0
    %493 = vmatprep.subr.mxu0 0.0
    %494 = vmatpush1.msra.mxu0 0.0
    %495 = vmatprep.subr.mxu0 0.0
    %496 = vmatpush1.msra.mxu0 0.0
    %497 = vmatprep.subr.mxu0 0.0
    %498 = vmatpush1.msra.mxu0 0.0
    %499 = vmatprep.subr.mxu0 0.0
    %500 = vmatpush1.msra.mxu0 0.0
    %501 = vmatprep.subr.mxu0 0.0
    %502 = vmatpush1.msra.mxu0 0.0
    %503 = vmatprep.subr.mxu0 0.0
    %504 = vmatpush1.msra.mxu0 0.0
    %505 = vmatprep.subr.mxu0 0.0
    %506 = vmatpush1.msra.mxu0 0.0
    %507 = vmatprep.subr.mxu0 0.0
    %508 = vmatpush1.msra.mxu0 0.0
    %509 = vmatprep.subr.mxu0 0.0
    %510 = vmatpush1.msra.mxu0 0.0
    %511 = vmatprep.subr.mxu0 0.0
    %512 = vmatpush1.msra.mxu0 0.0
    %513 = vmatprep.mubr.f32.mxu0 0.0
    %514 = vmatmul.mubr.f32.gmra.mrb[0].mxu0 %v441
    %v515 = vpop.f32.mrb[0].mxu0
    %v516 = vadd.f32 0.0, %v515
    %v517 = vpop.f32.mrb[0].mxu0
    %518 = vmatprep.mubr.f32.mxu0 0.0
    %519 = vmatmul.mubr.f32.gmra.mrb[0].mxu0 %v444
    %v520 = vpop.f32.mrb[0].mxu0
    %v521 = vadd.f32 0.0, %v520
    %v522 = vpop.f32.mrb[0].mxu0
    %523 = vmatprep.mubr.f32.mxu0 0.0
    %524 = vmatmul.mubr.f32.gmra.mrb[0].mxu0 %v447
    %v525 = vpop.f32.mrb[0].mxu0
    %v526 = vadd.f32 0.0, %v525
    %v527 = vpop.f32.mrb[0].mxu0
    %528 = vdwg.mxu0
    %vm529 = vcmask 195584
    %v531 = vsel %vm529, %v410, 0
    %533 = vmatprep.subr.mxu0 0.0
    %534 = vmatpush1.msra.mxu0 %v516
    %535 = vmatprep.subr.mxu0 0.0
    %536 = vmatpush1.msra.mxu0 %v521
    %537 = vmatprep.subr.mxu0 0.0
    %538 = vmatpush1.msra.mxu0 %v526
    %539 = vmatprep.subr.mxu0 0.0
    %540 = vmatpush1.msra.mxu0 0.0
    %541 = vmatprep.subr.mxu0 0.0
    %542 = vmatpush1.msra.mxu0 0.0
    %543 = vmatprep.subr.mxu0 0.0
    %544 = vmatpush1.msra.mxu0 0.0
    %545 = vmatprep.subr.mxu0 0.0
    %546 = vmatpush1.msra.mxu0 0.0
    %547 = vmatprep.subr.mxu0 0.0
    %548 = vmatpush1.msra.mxu0 0.0
    %549 = vmatprep.subr.mxu0 0.0
    %550 = vmatpush1.msra.mxu0 0.0
    %551 = vmatprep.subr.mxu0 0.0
    %552 = vmatpush1.msra.mxu0 0.0
    %553 = vmatprep.subr.mxu0 0.0
    %554 = vmatpush1.msra.mxu0 0.0
    %555 = vmatprep.subr.mxu0 0.0
    %556 = vmatpush1.msra.mxu0 0.0
    %557 = vmatprep.subr.mxu0 0.0
    %558 = vmatpush1.msra.mxu0 0.0
    %559 = vmatprep.subr.mxu0 0.0
    %560 = vmatpush1.msra.mxu0 0.0
    %561 = vmatprep.subr.mxu0 0.0
    %562 = vmatpush1.msra.mxu0 0.0
    %563 = vmatprep.subr.mxu0 0.0
    %564 = vmatpush1.msra.mxu0 0.0
    %565 = vmatprep.subr.mxu0 0.0
    %566 = vmatpush1.msra.mxu0 0.0
    %567 = vmatprep.subr.mxu0 0.0
    %568 = vmatpush1.msra.mxu0 0.0
    %569 = vmatprep.subr.mxu0 0.0
    %570 = vmatpush1.msra.mxu0 0.0
    %571 = vmatprep.subr.mxu0 0.0
    %572 = vmatpush1.msra.mxu0 0.0
    %573 = vmatprep.subr.mxu0 0.0
    %574 = vmatpush1.msra.mxu0 0.0
    %575 = vmatprep.subr.mxu0 0.0
    %576 = vmatpush1.msra.mxu0 0.0
    %577 = vmatprep.subr.mxu0 0.0
    %578 = vmatpush1.msra.mxu0 0.0
    %579 = vmatprep.subr.mxu0 0.0
    %580 = vmatpush1.msra.mxu0 0.0
    %581 = vmatprep.subr.mxu0 0.0
    %582 = vmatpush1.msra.mxu0 0.0
    %583 = vmatprep.subr.mxu0 0.0
    %584 = vmatpush1.msra.mxu0 0.0
    %585 = vmatprep.subr.mxu0 0.0
    %586 = vmatpush1.msra.mxu0 0.0
    %587 = vmatprep.subr.mxu0 0.0
    %588 = vmatpush1.msra.mxu0 0.0
    %589 = vmatprep.subr.mxu0 0.0
    %590 = vmatpush1.msra.mxu0 0.0
    %591 = vmatprep.subr.mxu0 0.0
    %592 = vmatpush1.msra.mxu0 0.0
    %593 = vmatprep.subr.mxu0 0.0
    %594 = vmatpush1.msra.mxu0 0.0
    %595 = vmatprep.subr.mxu0 0.0
    %596 = vmatpush1.msra.mxu0 0.0
    %597 = vmatprep.mubr.f32.mxu0 0.0
    %598 = vmatmul.mubr.f32.gmra.mrb[0].mxu0 %v531
    %v599 = vpop.f32.mrb[0].mxu0
    %v600 = vadd.f32 0.0, %v599
    %v601 = vpop.f32.mrb[0].mxu0
    %602 = vdwg.mxu0
    %v603 = vrcp.pop %v415
    %v604 = vmul.f32 %v600, %v603
    %v605 = vadd.f32 %v396, %v604
    %vm606 = vcmask 1040384
    %v607 = vsel %vm606, %v605, 0.0
    %608 = vadd.xlane.f32.xlu0 %v607
    %v609 = vpop.xlane.xlu0 %608
    %v610 = vrcp.pop 128.0
    %v611 = vmul.f32 %v609, %v610
    %v612 = vsub.f32 %v605, %v611
    %v613 = vmul.f32 %v612, %v612
    %v614 = vsel %vm606, %v613, 0.0
    %615 = vadd.xlane.f32.xlu0 %v614
    %v616 = vpop.xlane.xlu0 %615
    %v617 = vmul.f32 %v616, %v610
    %v618 = vadd.f32 %v617, 1e-05
    %v619 = vrsqrt.pop %v618
    %v620 = vmul.f32 %v612, %v619
    %v621 = vmax.f32 %v620, 0.0
    %v623 = vrot.slane %v621, 1
    %v625 = vadd.f32 %v42, %v623
    %626 = vst [vmem:[#allocation2] sm:$0xff] %v42
    %627 = vst [vmem:[#allocation2] sm:$0x80] %v625
    // Predicated region
    $region50: #{node_features_forward.1} parent=1 // pred_check
      _
    $region51: #{node_features_forward.1} parent=1 // pred_check_branch
      %629 = sbr.rel (0) target = $region53
    $region52: #{node_features_forward.1} parent=1 // pred_region
      %s631 = ssub.s32 128, 128
      %632 = vsyncadd [#allocation3], %s631
      %s634 = sshll.u32 [#allocation2], 4
      %s635 = int_to_ptr.vmem [resolvable:$true] %s634
      %637 = dma.vmem_to_hbm [thread:$0]  %s635, 128, %s12, [#allocation3]
    $region53: #{node_features_forward.1} parent=1 // pred_fallthru
      _
    // Predicated region
    $region54: #{node_features_forward.1} parent=1 // pred_check
      _
    $region55: #{node_features_forward.1} parent=1 // pred_check_branch
      %639 = sbr.rel (0) target = $region57
    $region56: #{node_features_forward.1} parent=1 // pred_region
      %640 = dma.done [#allocation3], 128
    $region57: #{node_features_forward.1} parent=1 // pred_fallthru
      _
    %641 = vsyncpa [#allocation3], 1

</llo_original>
